<compile_context>
chip_gen: v7x
topology: tpu7x:2x2x1
jax: 0.10.0
libtpu: 0.0.40
codegen_flags: <defaults>
</compile_context>

<pallas_src>
import math

import jax
import jax.numpy as jnp
from jax.experimental import pallas as pl
from jax.experimental.pallas import tpu as pltpu

_LANE = 128


def make_sinusoidal_pe(max_len, d_model, dtype=jnp.float32):
    """Matches the PyTorch buffer: pe[pos, 2i] = sin, pe[pos, 2i+1] = cos."""
    position = jnp.arange(max_len, dtype=jnp.float32)[:, None]            # (L, 1)
    div_term = jnp.exp(
        jnp.arange(0, d_model, 2, dtype=jnp.float32)
        * (-(math.log(10000.0) / d_model)))                               # (D/2,)
    angles = position * div_term                                          # (L, D/2)
    pe = jnp.zeros((max_len, d_model), dtype=jnp.float32)
    pe = pe.at[:, 0::2].set(jnp.sin(angles))
    pe = pe.at[:, 1::2].set(jnp.cos(angles))
    return pe.astype(dtype)


def _pe_add_kernel(x_ref, pe_ref, o_ref):
    # x_ref: (TB, TC) tile of the flattened input.
    # pe_ref: (1, TC) positional-encoding strip, broadcast over the batch rows.
    o_ref[...] = x_ref[...] + pe_ref[...]
    # TODO(synk): training-mode dropout (pltpu.prng_seed/prng_random_bits mask
    # with 1/(1-p) scaling) is not implemented; eval-mode semantics only.


def _sublane_pack(itemsize):
    return {1: 32, 2: 16}.get(itemsize, 8)


def _plan_tiles(B, SD, itemsize):
    """Pick (row_tile, col_tile, vmem_limit_bytes) for the (B, S*D) add.

    The pipeline holds 2 x-tiles + 2 out-tiles (+ one PE strip). Budgets are
    re-derived from the chip's physical VMEM so the same code fits v5e/v6e
    (128 MiB physical) and v7x (64 MiB physical)."""
    pack = _sublane_pack(itemsize)

    try:
        phys = pltpu.get_tpu_info().vmem_capacity_bytes
    except Exception:                       # unknown chip / interpret mode
        phys = 64 << 20                     # v7x-conservative fallback
    vmem_limit = int(min(phys * 3 // 4, 96 << 20))
    # Per x-tile byte budget: 4 buffered tiles (+PE strip) must sit well inside
    # vmem_limit; ~4-8 MiB tiles are already on the HBM-roofline plateau.
    tile_budget = max(512 << 10, min(8 << 20, vmem_limit // 8))

    # --- column (flattened S*D) axis: split only when even one pack-row strip
    # of the full row would blow the budget; keep the block a multiple of 128.
    if SD % _LANE == 0 and pack * SD * itemsize > tile_budget:
        tc = (tile_budget // (pack * itemsize)) // _LANE * _LANE
        tc = max(_LANE, min(tc, SD))
    else:
        tc = SD                             # full flattened row (correct even if <128)

    # --- row (batch) axis: multiple of the sublane pack; need not divide B.
    if B <= pack:
        tb = B                              # block == full dim, (8,128) rule satisfied
    else:
        rows = tile_budget // max(tc * itemsize, 1)
        tb = max(pack, min(rows, B) // pack * pack)
        if tc == SD and B * SD * itemsize > 4 * tile_budget:
            # v7x has 2 TensorCores: keep >= 4 grid steps for large inputs so the
            # "parallel" axis shards across cores and DMA/compute overlap.
            tb = min(tb, max(pack, (B // 4) // pack * pack))
    return tb, tc, vmem_limit


def positional_encoding(x, pe_table, *, donate_x=False):
    """x: (B, S, D); pe_table: (max_len, D). Returns x + pe_table[:S] (eval-mode dropout)."""
    B, S, D = x.shape
    SD = S * D
    # NOTE: PE is cast to x.dtype before the add (bf16 stays bf16, unlike
    # PyTorch's f32 promotion) -- intentional for this memory-bound op.
    pe_row = pe_table[:S].astype(x.dtype).reshape(1, SD)
    x2 = x.reshape(B, SD)                   # lane-dense last dim (S*D), not D
    itemsize = x2.dtype.itemsize

    tb, tc, vmem_limit = _plan_tiles(B, SD, itemsize)
    grid = (pl.cdiv(B, tb), pl.cdiv(SD, tc))   # Pallas pads partial edge blocks

    out = pl.pallas_call(
        _pe_add_kernel,
        out_shape=jax.ShapeDtypeStruct((B, SD), x.dtype),
        grid_spec=pltpu.PrefetchScalarGridSpec(
            num_scalar_prefetch=0,
            grid=grid,
            in_specs=[
                pl.BlockSpec((tb, tc), lambda i, j: (i, j)),   # x row/col tile
                pl.BlockSpec((1, tc), lambda i, j: (0, j)),    # PE strip (row-invariant)
            ],
            out_specs=pl.BlockSpec((tb, tc), lambda i, j: (i, j)),
        ),
        compiler_params=pltpu.CompilerParams(
            dimension_semantics=("parallel", "parallel"),
            vmem_limit_bytes=vmem_limit),
        cost_estimate=pl.CostEstimate(
            flops=B * SD,
            transcendentals=0,
            bytes_accessed=(2 * B * SD + SD) * itemsize),
        input_output_aliases=({0: 0} if donate_x else {}),
    )(x2, pe_row)
    return out.reshape(B, S, D)


def reference(x, pe_table):
    S = x.shape[1]
    return x + pe_table[None, :S, :].astype(x.dtype)


if __name__ == "__main__":
    B, S, D = 2, 8, 32                      # batch, seq, d_model
    max_len = 64

    key = jax.random.PRNGKey(0)
    x = jax.random.normal(key, (B, S, D), dtype=jnp.float32)
    pe_table = make_sinusoidal_pe(max_len, D, dtype=jnp.float32)

    out = jax.block_until_ready(positional_encoding(x, pe_table))

    ref = reference(x, pe_table)
    assert out.shape == (B, S, D)
    assert jnp.allclose(out, ref, atol=1e-6, rtol=1e-6), "mismatch vs reference"

    print("KERNEL_OK")
</pallas_src>

<mosaic_0001>
module attributes {stable_mosaic.version = 11 : i64} {
  func.func @_pe_add_kernel(%arg0: i32, %arg1: i32, %arg2: memref<2x256xf32, #tpu.memory_space<vmem>>, %arg3: memref<1x256xf32, #tpu.memory_space<vmem>>, %arg4: memref<2x256xf32, #tpu.memory_space<vmem>>) attributes {dimension_semantics = [#tpu.dimension_semantics<parallel>, #tpu.dimension_semantics<parallel>], iteration_bounds = array<i64: 1, 1>, scalar_prefetch = 0 : i64, scratch_operands = 0 : i64, tpu.core_type = #tpu.core_type<tc>, window_params = [{transform_indices = @transform_0, window_bounds = array<i64: 2, 256>}, {transform_indices = @transform_1, window_bounds = array<i64: 1, 256>}, {transform_indices = @transform_2, window_bounds = array<i64: 2, 256>}]} {
    %c0 = arith.constant 0 : index
    %c0_0 = arith.constant 0 : index
    %0 = vector.load %arg2[%c0, %c0_0] : memref<2x256xf32, #tpu.memory_space<vmem>>, vector<2x256xf32>
    %c0_1 = arith.constant 0 : index
    %c0_2 = arith.constant 0 : index
    %1 = vector.load %arg3[%c0_1, %c0_2] : memref<1x256xf32, #tpu.memory_space<vmem>>, vector<1x256xf32>
    %2 = vector.broadcast %1 : vector<1x256xf32> to vector<2x256xf32>
    %3 = arith.addf %0, %2 : vector<2x256xf32>
    %c0_3 = arith.constant 0 : index
    %c0_4 = arith.constant 0 : index
    %4 = vector.load %arg4[%c0_3, %c0_4] : memref<2x256xf32, #tpu.memory_space<vmem>>, vector<2x256xf32>
    tpu.vector_store %arg4[%c0_3, %c0_4], %3 {strides = array<i32>} : memref<2x256xf32, #tpu.memory_space<vmem>>, vector<2x256xf32>,
    return
  }
  func.func @transform_0(%arg0: i32, %arg1: i32) -> (i32, i32) {
    %c0_i32 = arith.constant 0 : i32
    return %arg0, %arg1 : i32, i32
  }
  func.func @transform_1(%arg0: i32, %arg1: i32) -> (i32, i32) {
    %c0_i32 = arith.constant 0 : i32
    %c0_i32_0 = arith.constant 0 : i32
    return %c0_i32, %arg1 : i32, i32
  }
  func.func @transform_2(%arg0: i32, %arg1: i32) -> (i32, i32) {
    %c0_i32 = arith.constant 0 : i32
    return %arg0, %arg1 : i32, i32
  }
}

</mosaic_0001>

<llo_original>
// kernel: tpu_custom_call.1
$region0: #{tpu_custom_call.1}
  #allocation0 [shape = 'u32[]', space=smem, size = 0x4, offset = 0x4, fixed_abs, tag = 'smem constant byte address 0x4 - core index']
  #allocation1 [shape = 'u32[144,128]{1,0:T(1,128)}', space=vmem, size = 0x12000, scoped, tag = 'internal scratch']
  %s0 = inlined_call_operand.hbm [shape: f32[2,256], index: 0, kind: input, shape index: {}]
  %s1 = inlined_call_operand.vmem [shape: f32[1,256], index: 1, kind: input, shape index: {}]
  %s2 = inlined_call_operand.hbm [shape: f32[2,256], index: 2, kind: output, shape index: {}]
  %s3 = sld [smem:[#allocation0]]
  $region22: #{tpu_custom_call.1} parent=0
    _
  %s5 = ssub.s32 1, %s3
  %s6 = scalar_select 0, %s5, %s3
  $region1: #{tpu_custom_call.1} parent=0
    #allocation2 [shape = 'u8[2048]{0}', space=vmem, size = 0x800, scoped, tag = 'input window, operand 0, single buffered']
    #allocation3 [shape = 's32[1]{0}', space=sflag, size = 0x4, scoped, tag = 'scoped memory for tpu_custom_call.1']
    #allocation4 [shape = 's32[1]{0}', space=sflag, size = 0x4, scoped, tag = 'scoped memory for tpu_custom_call.1']
    #allocation5 [shape = 'u8[2048]{0}', space=vmem, size = 0x800, scoped, tag = 'output window, operand 0, single buffered']
    %7 = vsyncpa [#allocation3], 0
    %8 = vsyncpa [#allocation4], 0
    // Predicated region
    $region2: #{tpu_custom_call.1} parent=1 // pred_check
      _
    $region3: #{tpu_custom_call.1} parent=1 // pred_check_branch
      %10 = sbr.rel (0) target = $region5
    $region4: #{tpu_custom_call.1} parent=1 // pred_region
      %s12 = ssub.s32 64, 64
      %13 = vsyncadd [#allocation3], %s12
      %s15 = sshll.u32 [#allocation2], 4
      %s16 = int_to_ptr.vmem [resolvable:$true] %s15
      %18 = dma.hbm_to_vmem [thread:$0]  %s0, 64, %s16, [#allocation3]
    $region5: #{tpu_custom_call.1} parent=1 // pred_fallthru
      _
    // Predicated region
    $region6: #{tpu_custom_call.1} parent=1 // pred_check
      _
    $region7: #{tpu_custom_call.1} parent=1 // pred_check_branch
      %20 = sbr.rel (0) target = $region9
    $region8: #{tpu_custom_call.1} parent=1 // pred_region
      _
    $region9: #{tpu_custom_call.1} parent=1 // pred_fallthru
      _
    // Predicated region
    $region10: #{tpu_custom_call.1} parent=1 // pred_check
      _
    $region11: #{tpu_custom_call.1} parent=1 // pred_check_branch
      %22 = sbr.rel (0) target = $region13
    $region12: #{tpu_custom_call.1} parent=1 // pred_region
      %23 = dma.done [#allocation3], 64
    $region13: #{tpu_custom_call.1} parent=1 // pred_fallthru
      _
    %v24 = vld [vmem:[#allocation2] sm:$0xf]
    %v25 = vld [vmem:[%s1] sm:$0x3]
    %v27 = vlaneseq
    %v28 = vshrl.u32 %v27, 7
    %v29 = vsub.s32 0, %v28
    %v30 = vrot.slane %v25, %v29
    %v31 = vlaneseq
    %v32 = vshrl.u32 %v31, 7
    %v33 = vsub.s32 1, %v32
    %v34 = vrot.slane %v25, %v33
    %v35 = vcombine.low %v30, %v34
    %v37 = vunpack.c.l.s4 1983009808
    %v38 = vunpack.c.0.s8 %v37
    %v39 = vlaneseq
    %v40 = vshrl.u32 %v39, 7
    %v41 = vsub.s32 %v38, %v40
    %v42 = vrot.slane %v35, %v41
    %v44 = vadd.f32 %v24, %v42
    %45 = vst [vmem:[#allocation5] sm:$0xf] %v44
    // Predicated region
    $region14: #{tpu_custom_call.1} parent=1 // pred_check
      _
    $region15: #{tpu_custom_call.1} parent=1 // pred_check_branch
      %47 = sbr.rel (0) target = $region17
    $region16: #{tpu_custom_call.1} parent=1 // pred_region
      %s49 = ssub.s32 64, 64
      %50 = vsyncadd [#allocation4], %s49
      %s52 = sshll.u32 [#allocation5], 4
      %s53 = int_to_ptr.vmem [resolvable:$true] %s52
      %55 = dma.vmem_to_hbm [thread:$0]  %s53, 64, %s2, [#allocation4]
    $region17: #{tpu_custom_call.1} parent=1 // pred_fallthru
      _
    // Predicated region
    $region18: #{tpu_custom_call.1} parent=1 // pred_check
      _
    $region19: #{tpu_custom_call.1} parent=1 // pred_check_branch
      %57 = sbr.rel (0) target = $region21
    $region20: #{tpu_custom_call.1} parent=1 // pred_region
      %58 = dma.done [#allocation4], 64
    $region21: #{tpu_custom_call.1} parent=1 // pred_fallthru
      _
    %59 = vsyncpa [#allocation3], 1
    %60 = vsyncpa [#allocation4], 1

</llo_original>
